<compile_context>
chip_gen: v5e
topology: v5e:2x2
jax: 0.10.0
libtpu: 0.0.40
codegen_flags: <defaults>
</compile_context>

<pallas_src>
import functools

import numpy as np
import jax
import jax.numpy as jnp
from jax.experimental import pallas as pl
from jax.experimental.pallas import tpu as pltpu

LANES = 128
SUBLANES = 8


def _round_up(a, b):
    return (a + b - 1) // b * b


def _cdiv(a, b):
    return (a + b - 1) // b


def _chip_config():
    """(max_tile_rows, num_slices) derived from the local TPU generation."""
    kind = ""
    try:
        kind = jax.devices()[0].device_kind.lower()
    except Exception:
        pass
    if ("v5 lite" in kind) or ("v5e" in kind) or ("v5lite" in kind):
        # v5e: single TensorCore, smaller scoped-VMEM defaults -> 2 MiB blocks.
        return 4096, 1
    if "v7" in kind:
        # v7x: 2 TensorCores/chip (shard the leading "parallel" axis),
        # 64 MiB VMEM per TC -> 4 MiB blocks still leave ample headroom.
        return 8192, 2
    # v6e (and other single-TC chips): big tiles, no slice split.
    return 8192, 1


def _binary_log_loss_kernel(x_ref, y_ref, o_ref, acc_ref, *, n_valid,
                            tile_rows, blocks_per_slice):
    c = pl.program_id(0)          # slice (TensorCore) axis — "parallel"
    i = pl.program_id(1)          # reduction axis — "arbitrary", innermost

    @pl.when(i == 0)
    def _():
        acc_ref[...] = jnp.zeros_like(acc_ref)

    tile_elems = tile_rows * LANES
    block_start = (c * blocks_per_slice + i) * tile_elems

    def accumulate(masked):
        # Loss is computed here (inside the pl.when branch) so the elementwise
        # math fuses into the per-vreg reduction — no (tile_rows,128) f32 temp.
        x = x_ref[...].astype(jnp.float32)
        y = y_ref[...].astype(jnp.float32)
        # -y*logsigmoid(x) - (1-y)*logsigmoid(-x) = max(x,0) - x*y + log1p(exp(-|x|))
        loss = jnp.maximum(x, 0.0) - x * y + jnp.log1p(jnp.exp(-jnp.abs(x)))
        if masked:
            # Ragged / padded / partial-block tail: mask by global flat index.
            # Garbage in the unfilled part of a partial block is discarded by
            # the elementwise select (safe even if it is NaN/Inf).
            row_ids = jax.lax.broadcasted_iota(jnp.int32, (tile_rows, LANES), 0)
            lane_ids = jax.lax.broadcasted_iota(jnp.int32, (tile_rows, LANES), 1)
            gidx = block_start + row_ids * LANES + lane_ids
            loss = jnp.where(gidx < n_valid, loss, 0.0)
        # Fold (tile_rows,128) to one (8,128) vreg of lane-parallel partial
        # sums (pure VPU adds), then accumulate.
        acc_ref[...] += loss.reshape(tile_rows // SUBLANES, SUBLANES, LANES).sum(axis=0)

    @pl.when(block_start + tile_elems <= n_valid)
    def _():
        accumulate(False)

    @pl.when(block_start + tile_elems > n_valid)
    def _():
        accumulate(True)

    @pl.when(i == pl.num_programs(1) - 1)
    def _():
        # Single cross-lane reduction per slice, only at the end.
        o_ref[0, 0] = jnp.sum(acc_ref[...])


def binary_log_loss(out_prod, y_s):
    """Mean binary log loss over all elements (matches BinaryLogLoss.forward)."""
    assert out_prod.shape == y_s.shape
    n_valid = int(np.prod(out_prod.shape))
    max_tile_rows, want_slices = _chip_config()

    # Contiguous flatten: a bitcast-level reshape, no extra HBM pass.
    x_flat = jnp.ravel(out_prod)
    y_flat = jnp.ravel(y_s)

    # Sublane packing of the narrowest stream: 8 rows for f32, 16 for bf16,
    # 32 for int8 — keeps every block's row count natively tileable.
    min_item = min(x_flat.dtype.itemsize, y_flat.dtype.itemsize)
    row_align = SUBLANES * max(1, 4 // max(min_item, 1))

    rows = max(_cdiv(n_valid, LANES), 1)
    arr_rows = max(rows, row_align)          # tiny inputs: one aligned group
    pad_elems = arr_rows * LANES - n_valid
    if pad_elems and rows >= row_align:
        # Only the <128-element ragged remainder forces a pad copy; row/tile/
        # slice alignment is handled by partial blocks + the in-kernel mask.
        pad_elems = _round_up(n_valid, LANES) - n_valid
        arr_rows = rows
    if pad_elems:
        x_flat = jnp.pad(x_flat, (0, pad_elems))
        y_flat = jnp.pad(y_flat, (0, pad_elems))

    x2 = x_flat.reshape(arr_rows, LANES)
    y2 = y_flat.reshape(arr_rows, LANES)

    # Slice (TensorCore) split only where it pays off and cannot create a
    # fully out-of-range block.
    num_slices = want_slices if arr_rows >= want_slices * 2 * row_align else 1

    # Adaptive tile: as large as the per-chip max, but shrunk toward the data
    # so padded-zero HBM reads stay below one sublane group.
    rows_per_slice = _cdiv(arr_rows, num_slices)
    nb_total = num_slices * max(1, _cdiv(rows_per_slice, max_tile_rows))
    tile_rows = min(max_tile_rows, _round_up(_cdiv(arr_rows, nb_total), row_align))
    tile_rows = min(tile_rows, (arr_rows // row_align) * row_align)
    blocks_per_slice = _cdiv(_cdiv(arr_rows, num_slices), tile_rows)

    in_spec = pl.BlockSpec((tile_rows, LANES),
                           lambda c, i: (c * blocks_per_slice + i, 0))
    # TODO(synk): on v7x, if xprof still shows exposed DMA at step boundaries,
    # add pipeline_mode=pl.Buffered(3) to the in_specs (VMEM headroom allows it).

    # Raise scoped VMEM to cover the double-buffered working set (v5e default
    # is only 16 MiB); cap well under v7x's 64 MiB physical VMEM.
    bytes_per_block = tile_rows * LANES * (x2.dtype.itemsize + y2.dtype.itemsize)
    vmem_limit = int(min(max(32 << 20, 2 * bytes_per_block + (24 << 20)), 56 << 20))

    kernel = functools.partial(
        _binary_log_loss_kernel,
        n_valid=n_valid,
        tile_rows=tile_rows,
        blocks_per_slice=blocks_per_slice,
    )

    partials = pl.pallas_call(
        kernel,
        out_shape=jax.ShapeDtypeStruct((num_slices, 1), jnp.float32),
        grid_spec=pltpu.PrefetchScalarGridSpec(
            num_scalar_prefetch=0,
            grid=(num_slices, blocks_per_slice),
            in_specs=[in_spec, in_spec],
            out_specs=pl.BlockSpec((1, 1), lambda c, i: (c, 0),
                                   memory_space=pltpu.SMEM),
            scratch_shapes=[pltpu.VMEM((SUBLANES, LANES), jnp.float32)],
        ),
        compiler_params=pltpu.CompilerParams(
            dimension_semantics=("parallel", "arbitrary"),
            vmem_limit_bytes=vmem_limit),
    )(x2, y2)

    # Combine per-slice partial sums and take the mean. (f32 divisor rounds
    # for n_valid > 2^24 — accepted deviation from the f64 reference.)
    return jnp.sum(partials) / jnp.float32(n_valid)


def _reference(out_prod, y_s):
    x = out_prod.astype(jnp.float32)
    y = y_s.astype(jnp.float32)
    return jnp.mean(-y * jax.nn.log_sigmoid(x) - (1.0 - y) * jax.nn.log_sigmoid(-x))


if __name__ == "__main__":
    key = jax.random.PRNGKey(0)
    k1, k2, k3, k4 = jax.random.split(key, 4)

    # Small shapes consistent with a binary-classification head over NCHW maps.
    out_prod = jax.random.normal(k1, (2, 4, 16, 16), dtype=jnp.float32) * 2.0
    y_s = (jax.random.uniform(k2, (2, 4, 16, 16)) > 0.5).astype(jnp.float32)

    loss = jax.block_until_ready(binary_log_loss(out_prod, y_s))
    ref = _reference(out_prod, y_s)
    assert np.allclose(np.asarray(loss), np.asarray(ref), rtol=1e-5, atol=1e-5), (
        float(loss), float(ref))

    # Extra check: non-128-aligned size + bf16 labels (0/1 is exact in bf16)
    # exercises the in-kernel tail mask and the narrow-label HBM path.
    xo = jax.random.normal(k3, (2, 3, 7, 5), dtype=jnp.float32) * 2.0
    yo = (jax.random.uniform(k4, (2, 3, 7, 5)) > 0.5).astype(jnp.bfloat16)
    loss2 = jax.block_until_ready(binary_log_loss(xo, yo))
    ref2 = _reference(xo, yo.astype(jnp.float32))
    assert np.allclose(np.asarray(loss2), np.asarray(ref2), rtol=1e-5, atol=1e-5), (
        float(loss2), float(ref2))

    print("KERNEL_OK")
</pallas_src>

<mosaic_0001>
module attributes {stable_mosaic.version = 11 : i64} {
  func.func @_binary_log_loss_kernel(%arg0: i32, %arg1: i32, %arg2: memref<16x128xf32, #tpu.memory_space<vmem>>, %arg3: memref<16x128xf32, #tpu.memory_space<vmem>>, %arg4: memref<1x1xf32, #tpu.memory_space<smem>>, %arg5: memref<8x128xf32, #tpu.memory_space<vmem>>) attributes {dimension_semantics = [#tpu.dimension_semantics<parallel>, #tpu.dimension_semantics<arbitrary>], iteration_bounds = array<i64: 1, 1>, scalar_prefetch = 0 : i64, scratch_operands = 1 : i64, tpu.core_type = #tpu.core_type<tc>, window_params = [{transform_indices = @transform_0, window_bounds = array<i64: 16, 128>}, {transform_indices = @transform_1, window_bounds = array<i64: 16, 128>}, {transform_indices = @transform_2, window_bounds = array<i64: 1, 1>}]} {
    %c0_i32 = arith.constant 0 : i32
    %0 = arith.cmpi eq, %arg1, %c0_i32 : i32
    %1 = arith.extui %0 : i1 to i32
    %c0_i32_0 = arith.constant 0 : i32
    %2 = arith.cmpi ne, %1, %c0_i32_0 : i32
    scf.if %2 {
      %cst = arith.constant 0.000000e+00 : f32
      %17 = vector.broadcast %cst : f32 to vector<8x128xf32>
      %c0 = arith.constant 0 : index
      %c0_9 = arith.constant 0 : index
      %18 = vector.load %arg5[%c0, %c0_9] : memref<8x128xf32, #tpu.memory_space<vmem>>, vector<8x128xf32>
      tpu.vector_store %arg5[%c0, %c0_9], %17 {strides = array<i32>} : memref<8x128xf32, #tpu.memory_space<vmem>>, vector<8x128xf32>,
    } else {
    }
    %c1_i32 = arith.constant 1 : i32
    %3 = arith.muli %arg0, %c1_i32 : i32
    %4 = arith.addi %3, %arg1 : i32
    %c2048_i32 = arith.constant 2048 : i32
    %5 = arith.muli %4, %c2048_i32 : i32
    %c2048_i32_1 = arith.constant 2048 : i32
    %6 = arith.addi %5, %c2048_i32_1 : i32
    %c2048_i32_2 = arith.constant 2048 : i32
    %7 = arith.cmpi sle, %6, %c2048_i32_2 : i32
    %8 = arith.extui %7 : i1 to i32
    %c0_i32_3 = arith.constant 0 : i32
    %9 = arith.cmpi ne, %8, %c0_i32_3 : i32
    scf.if %9 {
      %c0 = arith.constant 0 : index
      %c0_9 = arith.constant 0 : index
      %17 = vector.load %arg2[%c0, %c0_9] : memref<16x128xf32, #tpu.memory_space<vmem>>, vector<16x128xf32>
      %c0_10 = arith.constant 0 : index
      %c0_11 = arith.constant 0 : index
      %18 = vector.load %arg3[%c0_10, %c0_11] : memref<16x128xf32, #tpu.memory_space<vmem>>, vector<16x128xf32>
      %cst = arith.constant 0.000000e+00 : f32
      %19 = vector.broadcast %cst : f32 to vector<16x128xf32>
      %20 = arith.maximumf %17, %19 : vector<16x128xf32>
      %21 = arith.mulf %17, %18 : vector<16x128xf32>
      %22 = arith.subf %20, %21 : vector<16x128xf32>
      %23 = math.absf %17 : vector<16x128xf32>
      %cst_12 = arith.constant 0.000000e+00 : f32
      %24 = vector.broadcast %cst_12 : f32 to vector<16x128xf32>
      %25 = arith.subf %24, %23 : vector<16x128xf32>
      %26 = math.exp %25 : vector<16x128xf32>
      %27 = math.log1p %26 : vector<16x128xf32>
      %28 = arith.addf %22, %27 : vector<16x128xf32>
      %c0_13 = arith.constant 0 : index
      %c0_14 = arith.constant 0 : index
      %29 = vector.load %arg5[%c0_13, %c0_14] : memref<8x128xf32, #tpu.memory_space<vmem>>, vector<8x128xf32>
      %30 = vector.shape_cast %28 : vector<16x128xf32> to vector<2x8x128xf32>
      %cst_15 = arith.constant dense<0.000000e+00> : vector<8x128xf32>
      %31 = vector.multi_reduction <add>, %30, %cst_15 [0] : vector<2x8x128xf32> to vector<8x128xf32>
      %32 = arith.addf %29, %31 : vector<8x128xf32>
      %c0_16 = arith.constant 0 : index
      %c0_17 = arith.constant 0 : index
      %33 = vector.load %arg5[%c0_16, %c0_17] : memref<8x128xf32, #tpu.memory_space<vmem>>, vector<8x128xf32>
      tpu.vector_store %arg5[%c0_16, %c0_17], %32 {strides = array<i32>} : memref<8x128xf32, #tpu.memory_space<vmem>>, vector<8x128xf32>,
    } else {
    }
    %c2048_i32_4 = arith.constant 2048 : i32
    %10 = arith.addi %5, %c2048_i32_4 : i32
    %c2048_i32_5 = arith.constant 2048 : i32
    %11 = arith.cmpi sgt, %10, %c2048_i32_5 : i32
    %12 = arith.extui %11 : i1 to i32
    %c0_i32_6 = arith.constant 0 : i32
    %13 = arith.cmpi ne, %12, %c0_i32_6 : i32
    scf.if %13 {
      %c0 = arith.constant 0 : index
      %c0_9 = arith.constant 0 : index
      %17 = vector.load %arg2[%c0, %c0_9] : memref<16x128xf32, #tpu.memory_space<vmem>>, vector<16x128xf32>
      %c0_10 = arith.constant 0 : index
      %c0_11 = arith.constant 0 : index
      %18 = vector.load %arg3[%c0_10, %c0_11] : memref<16x128xf32, #tpu.memory_space<vmem>>, vector<16x128xf32>
      %cst = arith.constant 0.000000e+00 : f32
      %19 = vector.broadcast %cst : f32 to vector<16x128xf32>
      %20 = arith.maximumf %17, %19 : vector<16x128xf32>
      %21 = arith.mulf %17, %18 : vector<16x128xf32>
      %22 = arith.subf %20, %21 : vector<16x128xf32>
      %23 = math.absf %17 : vector<16x128xf32>
      %cst_12 = arith.constant 0.000000e+00 : f32
      %24 = vector.broadcast %cst_12 : f32 to vector<16x128xf32>
      %25 = arith.subf %24, %23 : vector<16x128xf32>
      %26 = math.exp %25 : vector<16x128xf32>
      %27 = math.log1p %26 : vector<16x128xf32>
      %28 = arith.addf %22, %27 : vector<16x128xf32>
      %29 = tpu.iota {dimensions = array<i32: 0>} : vector<16x128xi32>
      %30 = tpu.iota {dimensions = array<i32: 1>} : vector<16x128xi32>
      %c128_i32 = arith.constant 128 : i32
      %31 = vector.broadcast %c128_i32 : i32 to vector<16x128xi32>
      %32 = arith.muli %29, %31 : vector<16x128xi32>
      %33 = vector.broadcast %5 : i32 to vector<16x128xi32>
      %34 = arith.addi %33, %32 : vector<16x128xi32>
      %35 = arith.addi %34, %30 : vector<16x128xi32>
      %c2048_i32_13 = arith.constant 2048 : i32
      %36 = vector.broadcast %c2048_i32_13 : i32 to vector<16x128xi32>
      %37 = arith.cmpi slt, %35, %36 : vector<16x128xi32>
      %cst_14 = arith.constant 0.000000e+00 : f32
      %38 = vector.broadcast %cst_14 : f32 to vector<16x128xf32>
      %39 = arith.select %37, %28, %38 : vector<16x128xi1>, vector<16x128xf32>
      %c0_15 = arith.constant 0 : index
      %c0_16 = arith.constant 0 : index
      %40 = vector.load %arg5[%c0_15, %c0_16] : memref<8x128xf32, #tpu.memory_space<vmem>>, vector<8x128xf32>
      %41 = vector.shape_cast %39 : vector<16x128xf32> to vector<2x8x128xf32>
      %cst_17 = arith.constant dense<0.000000e+00> : vector<8x128xf32>
      %42 = vector.multi_reduction <add>, %41, %cst_17 [0] : vector<2x8x128xf32> to vector<8x128xf32>
      %43 = arith.addf %40, %42 : vector<8x128xf32>
      %c0_18 = arith.constant 0 : index
      %c0_19 = arith.constant 0 : index
      %44 = vector.load %arg5[%c0_18, %c0_19] : memref<8x128xf32, #tpu.memory_space<vmem>>, vector<8x128xf32>
      tpu.vector_store %arg5[%c0_18, %c0_19], %43 {strides = array<i32>} : memref<8x128xf32, #tpu.memory_space<vmem>>, vector<8x128xf32>,
    } else {
    }
    %c0_i32_7 = arith.constant 0 : i32
    %14 = arith.cmpi eq, %arg1, %c0_i32_7 : i32
    %15 = arith.extui %14 : i1 to i32
    %c0_i32_8 = arith.constant 0 : i32
    %16 = arith.cmpi ne, %15, %c0_i32_8 : i32
    scf.if %16 {
      %c0 = arith.constant 0 : index
      %c0_9 = arith.constant 0 : index
      %17 = vector.load %arg5[%c0, %c0_9] : memref<8x128xf32, #tpu.memory_space<vmem>>, vector<8x128xf32>
      %18 = vector.shape_cast %17 : vector<8x128xf32> to vector<1x8x128xf32>
      %cst = arith.constant dense<0.000000e+00> : vector<1xf32>
      %19 = vector.multi_reduction <add>, %18, %cst [1, 2] : vector<1x8x128xf32> to vector<1xf32>
      %20 = vector.shape_cast %19 : vector<1xf32> to vector<1x1x1xf32>
      %21 = vector.extract %20[0, 0, 0] : f32 from vector<1x1x1xf32>
      %c0_10 = arith.constant 0 : index
      %c0_11 = arith.constant 0 : index
      %22 = memref.load %arg4[%c0_10, %c0_11] : memref<1x1xf32, #tpu.memory_space<smem>>
      memref.store %21, %arg4[%c0_10, %c0_11] : memref<1x1xf32, #tpu.memory_space<smem>>
    } else {
    }
    return
  }
  func.func @transform_0(%arg0: i32, %arg1: i32) -> (i32, i32) {
    %c1_i32 = arith.constant 1 : i32
    %0 = arith.muli %arg0, %c1_i32 : i32
    %1 = arith.addi %0, %arg1 : i32
    %c0_i32 = arith.constant 0 : i32
    %c0_i32_0 = arith.constant 0 : i32
    return %1, %c0_i32 : i32, i32
  }
  func.func @transform_1(%arg0: i32, %arg1: i32) -> (i32, i32) {
    %c1_i32 = arith.constant 1 : i32
    %0 = arith.muli %arg0, %c1_i32 : i32
    %1 = arith.addi %0, %arg1 : i32
    %c0_i32 = arith.constant 0 : i32
    %c0_i32_0 = arith.constant 0 : i32
    return %1, %c0_i32 : i32, i32
  }
  func.func @transform_2(%arg0: i32, %arg1: i32) -> (i32, i32) {
    %c0_i32 = arith.constant 0 : i32
    %c0_i32_0 = arith.constant 0 : i32
    return %arg0, %c0_i32 : i32, i32
  }
}

</mosaic_0001>

<llo_original>
// kernel: tpu_custom_call.1
$region0: #{tpu_custom_call.1}
  #allocation0 [shape = 'u32[]', space=smem, size = 0x4, offset = 0x4, fixed_abs, tag = 'smem constant byte address 0x4 - core index']
  #allocation1 [shape = 'u32[72,128]{1,0:T(1,128)}', space=vmem, size = 0x9000, scoped, tag = 'internal scratch']
  #allocation2 [shape = 'f32[8,128]{1,0:T(8,128)}', space=vmem, size = 0x1000, scoped, tag = 'scratch operand']
  %s0 = inlined_call_operand.hbm [shape: f32[16,128], index: 0, kind: input, shape index: {}]
  %s1 = inlined_call_operand.hbm [shape: f32[16,128], index: 1, kind: input, shape index: {}]
  %s2 = inlined_call_operand.hbm [shape: f32[1,1], index: 2, kind: output, shape index: {}]
  %s3 = sld [smem:[#allocation0]]
  $region42: #{tpu_custom_call.1} parent=0
    _
  %s5 = ssub.s32 1, %s3
  %s6 = scalar_select 0, %s5, %s3
  $region1: #{tpu_custom_call.1} parent=0
    #allocation3 [shape = 'u8[8192]{0}', space=vmem, size = 0x2000, scoped, tag = 'input window, operand 0, single buffered']
    #allocation4 [shape = 's32[1]{0}', space=sflag, size = 0x4, scoped, tag = 'scoped memory for tpu_custom_call.1']
    #allocation5 [shape = 's32[1]{0}', space=sflag, size = 0x4, scoped, tag = 'scoped memory for tpu_custom_call.1']
    #allocation6 [shape = 'u8[8192]{0}', space=vmem, size = 0x2000, scoped, tag = 'input window, operand 1, single buffered']
    #allocation7 [shape = 's32[1]{0}', space=sflag, size = 0x4, scoped, tag = 'scoped memory for tpu_custom_call.1']
    #allocation8 [shape = 'u8[512]{0}', space=smem, size = 0x200, scoped, tag = 'output window, operand 0, single buffered']
    %7 = vsyncpa [#allocation4], 0
    %8 = vsyncpa [#allocation7], 0
    %9 = vsyncpa [#allocation5], 0
    // Predicated region
    $region2: #{tpu_custom_call.1} parent=1 // pred_check
      _
    $region3: #{tpu_custom_call.1} parent=1 // pred_check_branch
      %11 = sbr.rel (0) target = $region5
    $region4: #{tpu_custom_call.1} parent=1 // pred_region
      %s12 = sadd.s32 0, 0
      %s13 = smul.u32 2, %s12
      %15 = vsyncadd [#allocation4], 0
      %s16 = smul.addr %s13, 8
      %s17 = scalar_lea.hbm %s0, %s16
      %s18 = sshll.u32 %s17, 4
      %s19 = int_to_ptr.hbm [resolvable:$true] %s18
      %s20 = sshll.u32 [#allocation3], 4
      %s21 = int_to_ptr.vmem [resolvable:$true] %s20
      %26 = dma.hbm_to_vmem [thread:$0]  %s19, 256, %s21, [#allocation4], 128, 128, 8
    $region5: #{tpu_custom_call.1} parent=1 // pred_fallthru
      _
    // Predicated region
    $region6: #{tpu_custom_call.1} parent=1 // pred_check
      _
    $region7: #{tpu_custom_call.1} parent=1 // pred_check_branch
      %28 = sbr.rel (0) target = $region9
    $region8: #{tpu_custom_call.1} parent=1 // pred_region
      %s29 = sadd.s32 0, 0
      %s30 = smul.u32 2, %s29
      %32 = vsyncadd [#allocation7], 0
      %s33 = smul.addr %s30, 8
      %s34 = scalar_lea.hbm %s1, %s33
      %s35 = sshll.u32 %s34, 4
      %s36 = int_to_ptr.hbm [resolvable:$true] %s35
      %s37 = sshll.u32 [#allocation6], 4
      %s38 = int_to_ptr.vmem [resolvable:$true] %s37
      %43 = dma.hbm_to_vmem [thread:$0]  %s36, 256, %s38, [#allocation7], 128, 128, 8
    $region9: #{tpu_custom_call.1} parent=1 // pred_fallthru
      _
    // Predicated region
    $region10: #{tpu_custom_call.1} parent=1 // pred_check
      _
    $region11: #{tpu_custom_call.1} parent=1 // pred_check_branch
      %45 = sbr.rel (0) target = $region13
    $region12: #{tpu_custom_call.1} parent=1 // pred_region
      %47 = dma.done [#allocation4], 256
    $region13: #{tpu_custom_call.1} parent=1 // pred_fallthru
      _
    // Predicated region
    $region14: #{tpu_custom_call.1} parent=1 // pred_check
      _
    $region15: #{tpu_custom_call.1} parent=1 // pred_check_branch
      %49 = sbr.rel (0) target = $region17
    $region16: #{tpu_custom_call.1} parent=1 // pred_region
      %51 = dma.done [#allocation7], 256
    $region17: #{tpu_custom_call.1} parent=1 // pred_fallthru
      _
    %s52 = sadd.s32 0, 0
    %s53 = smul.u32 2, %s52
    %s54 = sadd.s32 0, 0
    %s55 = smul.u32 2, %s54
    %p56 = scmp.eq.s32.totalorder 0, 0
    // Predicated region
    $region18: #{tpu_custom_call.1} parent=1 // pred_check
      %p57 = pneg %p56
    $region19: #{tpu_custom_call.1} parent=1 // pred_check_branch
      %59 = sbr.rel (%p57) target = $region21
    $region20: #{tpu_custom_call.1} parent=1 // pred_region
      %60 = vst [vmem:[#allocation2] sm:$0xff] 0.0
    $region21: #{tpu_custom_call.1} parent=1 // pred_fallthru
      _
    %s61 = sadd.s32 0, 0
    %s62 = smul.u32 %s61, 2048
    %s63 = sadd.s32 %s62, 2048
    %p64 = scmp.le.s32.totalorder %s63, 2048
    // Predicated region
    $region22: #{tpu_custom_call.1} parent=1 // pred_check
      %p65 = pneg %p64
    $region23: #{tpu_custom_call.1} parent=1 // pred_check_branch
      %67 = sbr.rel (%p65) target = $region25
    $region24: #{tpu_custom_call.1} parent=1 // pred_region
      %v68 = vld [vmem:[#allocation3] sm:$0xff]
      %v69 = vld [vmem:[#allocation3 + $0x8] sm:$0xff]
      %v70 = vld [vmem:[#allocation6] sm:$0xff]
      %v71 = vld [vmem:[#allocation6 + $0x8] sm:$0xff]
      %v72 = vmax.f32 %v68, 0.0
      %v73 = vmax.f32 %v69, 0.0
      %v74 = vmul.f32 %v68, %v70
      %v75 = vmul.f32 %v69, %v71
      %v76 = vsub.f32 %v72, %v74
      %v77 = vsub.f32 %v73, %v75
      %v78 = vand.u32 2147483647, %v68
      %v79 = vand.u32 2147483647, %v69
      %v80 = vsub.f32 0.0, %v78
      %v81 = vsub.f32 0.0, %v79
      %v82 = vmul.f32 %v80, 1.442695
      %v83 = vpow.pop %v82
      %v84 = vmul.f32 %v81, 1.442695
      %v85 = vpow.pop %v84
      %v86 = vadd.f32 %v83, 1.0
      %v87 = vlog2.pop %v86
      %v88 = vmul.f32 %v87, 0.6931472
      %v89 = vmul.f32 -0.5, %v83
      %v90 = vadd.f32 %v89, 1.0
      %v91 = vmul.f32 %v90, %v83
      %v92 = vand.u32 2147483647, %v83
      %vm93 = vcmp.lt.f32.partialorder %v92, 0.0004427343
      %v94 = vsel %vm93, %v91, %v88
      %v95 = vadd.f32 %v85, 1.0
      %v96 = vlog2.pop %v95
      %v97 = vmul.f32 %v96, 0.6931472
      %v98 = vmul.f32 -0.5, %v85
      %v99 = vadd.f32 %v98, 1.0
      %v100 = vmul.f32 %v99, %v85
      %v101 = vand.u32 2147483647, %v85
      %vm102 = vcmp.lt.f32.partialorder %v101, 0.0004427343
      %v103 = vsel %vm102, %v100, %v97
      %v104 = vadd.f32 %v76, %v94
      %v105 = vadd.f32 %v77, %v103
      %v106 = vld [vmem:[#allocation2] sm:$0xff]
      %v107 = vadd.f32 %v104, %v105
      %v108 = vadd.f32 %v106, %v107
      %109 = vst [vmem:[#allocation2] sm:$0xff] %v108
    $region25: #{tpu_custom_call.1} parent=1 // pred_fallthru
      _
    %p110 = scmp.gt.s32.totalorder %s63, 2048
    // Predicated region
    $region26: #{tpu_custom_call.1} parent=1 // pred_check
      %p111 = pneg %p110
    $region27: #{tpu_custom_call.1} parent=1 // pred_check_branch
      %113 = sbr.rel (%p111) target = $region29
    $region28: #{tpu_custom_call.1} parent=1 // pred_region
      %v114 = vld [vmem:[#allocation3] sm:$0xff]
      %v115 = vld [vmem:[#allocation3 + $0x8] sm:$0xff]
      %v116 = vld [vmem:[#allocation6] sm:$0xff]
      %v117 = vld [vmem:[#allocation6 + $0x8] sm:$0xff]
      %v118 = vmax.f32 %v114, 0.0
      %v119 = vmax.f32 %v115, 0.0
      %v120 = vmul.f32 %v114, %v116
      %v121 = vmul.f32 %v115, %v117
      %v122 = vsub.f32 %v118, %v120
      %v123 = vsub.f32 %v119, %v121
      %v124 = vand.u32 2147483647, %v114
      %v125 = vand.u32 2147483647, %v115
      %v126 = vsub.f32 0.0, %v124
      %v127 = vsub.f32 0.0, %v125
      %v128 = vmul.f32 %v126, 1.442695
      %v129 = vpow.pop %v128
      %v130 = vmul.f32 %v127, 1.442695
      %v131 = vpow.pop %v130
      %v132 = vadd.f32 %v129, 1.0
      %v133 = vlog2.pop %v132
      %v134 = vmul.f32 %v133, 0.6931472
      %v135 = vmul.f32 -0.5, %v129
      %v136 = vadd.f32 %v135, 1.0
      %v137 = vmul.f32 %v136, %v129
      %v138 = vand.u32 2147483647, %v129
      %vm139 = vcmp.lt.f32.partialorder %v138, 0.0004427343
      %v140 = vsel %vm139, %v137, %v134
      %v141 = vadd.f32 %v131, 1.0
      %v142 = vlog2.pop %v141
      %v143 = vmul.f32 %v142, 0.6931472
      %v144 = vmul.f32 -0.5, %v131
      %v145 = vadd.f32 %v144, 1.0
      %v146 = vmul.f32 %v145, %v131
      %v147 = vand.u32 2147483647, %v131
      %vm148 = vcmp.lt.f32.partialorder %v147, 0.0004427343
      %v149 = vsel %vm148, %v146, %v143
      %v150 = vadd.f32 %v122, %v140
      %v151 = vadd.f32 %v123, %v149
      %v152 = vlaneseq
      %v153 = vshrl.u32 %v152, 7
      %v154 = vadd.s32 %v153, 8
      %v155 = vlaneseq
      %v156 = vand.u32 %v155, 127
      %v157 = vmul.u32 %v153, 128
      %v158 = vmul.u32 %v154, 128
      %v159 = vstv %s62
      %v160 = vadd.s32 %v159, %v157
      %v161 = vadd.s32 %v159, %v158
      %v162 = vadd.s32 %v160, %v156
      %v163 = vadd.s32 %v161, %v156
      %vm164 = vcmp.lt.s32.totalorder %v162, 2048
      %vm165 = vcmp.lt.s32.totalorder %v163, 2048
      %v166 = vsel %vm164, %v150, 0.0
      %v167 = vsel %vm165, %v151, 0.0
      %v168 = vld [vmem:[#allocation2] sm:$0xff]
      %v169 = vadd.f32 %v166, %v167
      %v170 = vadd.f32 %v168, %v169
      %171 = vst [vmem:[#allocation2] sm:$0xff] %v170
    $region29: #{tpu_custom_call.1} parent=1 // pred_fallthru
      _
    // Predicated region
    $region30: #{tpu_custom_call.1} parent=1 // pred_check
      %p172 = pneg %p56
    $region31: #{tpu_custom_call.1} parent=1 // pred_check_branch
      %174 = sbr.rel (%p172) target = $region33
    $region32: #{tpu_custom_call.1} parent=1 // pred_region
      %v175 = vld [vmem:[#allocation2] sm:$0xff]
      %176 = vadd.xlane.f32.xlu0 %v175
      %v177 = vpop.xlane.xlu0 %176
      %v178 = vrot.slane %v177, 4
      %v179 = vadd.f32 %v177, %v178
      %v180 = vrot.slane %v179, 2
      %v181 = vadd.f32 %v179, %v180
      %v182 = vrot.slane %v181, 1
      %v183 = vadd.f32 %v181, %v182
      %s184 = vtos %v183
      %s185 = scalar_lea.smem [#allocation8], 0
      %186 = sst [smem:[%s185]] %s184
    $region33: #{tpu_custom_call.1} parent=1 // pred_fallthru
      _
    // Predicated region
    $region34: #{tpu_custom_call.1} parent=1 // pred_check
      _
    $region35: #{tpu_custom_call.1} parent=1 // pred_check_branch
      %188 = sbr.rel (0) target = $region37
    $region36: #{tpu_custom_call.1} parent=1 // pred_region
      %190 = vsyncadd [#allocation5], 0
      %s192 = sshll.u32 %s2, 4
      %s193 = int_to_ptr.hbm [resolvable:$true] %s192
      %195 = dma.smem_to_hbm [#allocation8], 16, %s193, [#allocation5]
    $region37: #{tpu_custom_call.1} parent=1 // pred_fallthru
      _
    // Predicated region
    $region38: #{tpu_custom_call.1} parent=1 // pred_check
      _
    $region39: #{tpu_custom_call.1} parent=1 // pred_check_branch
      %197 = sbr.rel (0) target = $region41
    $region40: #{tpu_custom_call.1} parent=1 // pred_region
      %199 = dma.done [#allocation5], 16
    $region41: #{tpu_custom_call.1} parent=1 // pred_fallthru
      _
    %200 = sfence
    %201 = vsyncpa [#allocation4], 1
    %202 = vsyncpa [#allocation7], 1
    %203 = vsyncpa [#allocation5], 1

</llo_original>
